<compile_context>
chip_gen: v7x
topology: tpu7x:2x2x1
jax: 0.10.0
libtpu: 0.0.40
codegen_flags: <defaults>
</compile_context>

<pallas_src>
import jax
import jax.numpy as jnp
from jax.experimental import pallas as pl
from jax.experimental.pallas import tpu as pltpu


def _normalize_kernel(stats_ref, img_ref, out_ref):
    # stats_ref : (row_tile, 2) f32 -- column 0 = 1/std, column 1 = -mean/std
    # img_ref, out_ref : (row_tile, col_tile) lane-dense tiles (VMEM)
    scale = stats_ref[:, 0:1]
    bias = stats_ref[:, 1:2]
    x = img_ref[...].astype(jnp.float32)
    out_ref[...] = (x * scale + bias).astype(out_ref.dtype)


def _aligned_tile(dim, align, max_elems):
    """Largest multiple of `align` <= min(dim, max_elems); the full dim only
    when dim <= align (full-extent blocks are always legal).  Never returns a
    huge unaligned full dimension: ragged trailing blocks are handled by
    Pallas partial-block write masking instead, keeping the double-buffered
    VMEM footprint bounded."""
    if dim <= align:
        return dim
    t = (min(dim, max_elems) // align) * align
    return max(align, t)


def normalization(img, mean, std, *, force_pallas=False):
    """(img - mean[:,None,None]) / std[:,None,None] for NCHW `img`."""
    N, C, H, W = img.shape
    mean_f32 = jnp.asarray(mean, dtype=jnp.float32).reshape(C)
    std_f32 = jnp.asarray(std, dtype=jnp.float32).reshape(C)

    itemsize = jnp.dtype(img.dtype).itemsize
    total_bytes = N * C * H * W * itemsize

    # Small-input fast path: pallas_call launch/grid overhead dominates tiny
    # tensors; the fused XLA broadcast is strictly faster there.
    if not force_pallas and total_bytes < (256 << 10):
        out = (img.astype(jnp.float32) - mean_f32.reshape(1, C, 1, 1)) \
              / std_f32.reshape(1, C, 1, 1)
        return out.astype(img.dtype)

    rows, cols = N * C, H * W

    # Folded FMA coefficients, kept in f32; one merged (rows, 2) stats array.
    scale = 1.0 / std_f32                      # (C,)
    bias = -mean_f32 * scale                   # (C,)
    stats = jnp.stack([jnp.tile(scale, N), jnp.tile(bias, N)], axis=1)  # (rows, 2)

    x2d = img.reshape(rows, cols)              # lane-dense flattened view

    # ---- generation-aware block budget -----------------------------------
    try:
        vmem_cap = int(pltpu.get_tpu_info().vmem_capacity_bytes)
    except Exception:
        vmem_cap = 64 << 20                    # conservative (v7x-sized) fallback
    budget = min(8 << 20, max(1 << 20, vmem_cap // 16))   # img bytes per block

    # dtype-aware sublane alignment: 8 (f32), 16 (bf16/f16), 32 (int8/uint8).
    sub_align = 8 * max(1, 4 // itemsize)

    if cols * itemsize * min(rows, sub_align) <= budget:
        # Full-width rows: fully contiguous per-block DMA, unmasked wide vst.
        col_tile = cols
        row_tile = _aligned_tile(rows, sub_align,
                                 max(sub_align, budget // (cols * itemsize)))
    else:
        # Huge spatial extent: thin row slabs, wide 128-aligned column tiles.
        row_tile = rows if rows <= sub_align else sub_align
        col_tile = _aligned_tile(cols, 128,
                                 max(128, budget // (itemsize * row_tile)))

    # Megacore friendliness (v7x has 2 TCs): split a single-step grid on
    # non-trivial inputs so both cores get work.
    grid = (pl.cdiv(rows, row_tile), pl.cdiv(cols, col_tile))
    if grid[0] * grid[1] == 1 and total_bytes > (1 << 20):
        if rows >= 2 * sub_align:
            row_tile = max(sub_align, ((rows // 2) // sub_align) * sub_align)
        elif cols >= 2 * 128:
            col_tile = max(128, ((cols // 2) // 128) * 128)
        grid = (pl.cdiv(rows, row_tile), pl.cdiv(cols, col_tile))

    # Explicit VMEM budget: double-buffered img-in + out blocks plus the
    # lane-padded (row_tile, 2) -> (row_tile, 128) stats block, with headroom.
    img_block = row_tile * col_tile * itemsize
    stats_block = row_tile * 128 * 4
    needed = 2 * (2 * img_block + stats_block)
    vmem_limit = int(min(max(needed + (2 << 20), 16 << 20), vmem_cap * 3 // 4))

    # NOTE: ragged trailing blocks (when tiles don't divide rows/cols) read
    # unspecified padding for img/stats; harmless here because out-of-bounds
    # writes are masked and the kernel is purely elementwise.
    out2d = pl.pallas_call(
        _normalize_kernel,
        out_shape=jax.ShapeDtypeStruct((rows, cols), img.dtype),
        grid=grid,
        in_specs=[
            pl.BlockSpec((row_tile, 2), lambda i, j: (i, 0)),          # stats
            pl.BlockSpec((row_tile, col_tile), lambda i, j: (i, j)),   # img
        ],
        out_specs=pl.BlockSpec((row_tile, col_tile), lambda i, j: (i, j)),
        compiler_params=pltpu.CompilerParams(
            dimension_semantics=("parallel", "parallel"),
            vmem_limit_bytes=vmem_limit,
        ),
    )(stats, x2d)

    return out2d.reshape(N, C, H, W)


if __name__ == "__main__":
    key = jax.random.PRNGKey(0)
    k1, k2 = jax.random.split(key)

    # Small shapes consistent with the module: N=2, C=4, H=W=16.
    N, C, H, W = 2, 4, 16, 16
    img = jax.random.uniform(k1, (N, C, H, W), dtype=jnp.float32)

    # Deterministic per-channel statistics (ImageNet-style, padded to C=4),
    # analogous to the tensors built in Normalization.__init__.
    mean = jnp.array([0.485, 0.456, 0.406, 0.500], dtype=jnp.float32)
    std = jnp.array([0.229, 0.224, 0.225, 0.250], dtype=jnp.float32)

    out = normalization(img, mean, std, force_pallas=True)
    out = jax.block_until_ready(out)
    ref = (img - mean.reshape(-1, 1, 1)) / std.reshape(-1, 1, 1)
    assert out.shape == (N, C, H, W)
    assert jnp.allclose(out, ref, rtol=1e-5, atol=1e-5)

    # Second check: non-8/128-aligned shape to exercise full-extent tiles.
    N2, C2, H2, W2 = 2, 3, 17, 23
    img2 = jax.random.uniform(k2, (N2, C2, H2, W2), dtype=jnp.float32)
    mean2 = jnp.array([0.485, 0.456, 0.406], dtype=jnp.float32)
    std2 = jnp.array([0.229, 0.224, 0.225], dtype=jnp.float32)
    out2 = jax.block_until_ready(normalization(img2, mean2, std2, force_pallas=True))
    ref2 = (img2 - mean2.reshape(-1, 1, 1)) / std2.reshape(-1, 1, 1)
    assert jnp.allclose(out2, ref2, rtol=1e-5, atol=1e-5)

    print("KERNEL_OK")
</pallas_src>

<mosaic_0001>
module attributes {stable_mosaic.version = 11 : i64} {
  func.func @_normalize_kernel(%arg0: i32, %arg1: i32, %arg2: memref<8x2xf32, #tpu.memory_space<vmem>>, %arg3: memref<8x256xf32, #tpu.memory_space<vmem>>, %arg4: memref<8x256xf32, #tpu.memory_space<vmem>>) attributes {dimension_semantics = [#tpu.dimension_semantics<parallel>, #tpu.dimension_semantics<parallel>], iteration_bounds = array<i64: 1, 1>, scalar_prefetch = 0 : i64, scratch_operands = 0 : i64, tpu.core_type = #tpu.core_type<tc>, window_params = [{transform_indices = @transform_0, window_bounds = array<i64: 8, 2>}, {transform_indices = @transform_1, window_bounds = array<i64: 8, 256>}, {transform_indices = @transform_2, window_bounds = array<i64: 8, 256>}]} {
    %c0 = arith.constant 0 : index
    %c0_0 = arith.constant 0 : index
    %0 = vector.load %arg2[%c0, %c0_0] : memref<8x2xf32, #tpu.memory_space<vmem>>, vector<8x1xf32>
    %c0_1 = arith.constant 0 : index
    %c1 = arith.constant 1 : index
    %1 = vector.load %arg2[%c0_1, %c1] : memref<8x2xf32, #tpu.memory_space<vmem>>, vector<8x1xf32>
    %c0_2 = arith.constant 0 : index
    %c0_3 = arith.constant 0 : index
    %2 = vector.load %arg3[%c0_2, %c0_3] : memref<8x256xf32, #tpu.memory_space<vmem>>, vector<8x256xf32>
    %3 = vector.broadcast %0 : vector<8x1xf32> to vector<8x256xf32>
    %4 = arith.mulf %2, %3 : vector<8x256xf32>
    %5 = vector.broadcast %1 : vector<8x1xf32> to vector<8x256xf32>
    %6 = arith.addf %4, %5 : vector<8x256xf32>
    %c0_4 = arith.constant 0 : index
    %c0_5 = arith.constant 0 : index
    %7 = vector.load %arg4[%c0_4, %c0_5] : memref<8x256xf32, #tpu.memory_space<vmem>>, vector<8x256xf32>
    tpu.vector_store %arg4[%c0_4, %c0_5], %6 {strides = array<i32>} : memref<8x256xf32, #tpu.memory_space<vmem>>, vector<8x256xf32>,
    return
  }
  func.func @transform_0(%arg0: i32, %arg1: i32) -> (i32, i32) {
    %c0_i32 = arith.constant 0 : i32
    %c0_i32_0 = arith.constant 0 : i32
    return %arg0, %c0_i32 : i32, i32
  }
  func.func @transform_1(%arg0: i32, %arg1: i32) -> (i32, i32) {
    %c0_i32 = arith.constant 0 : i32
    return %arg0, %arg1 : i32, i32
  }
  func.func @transform_2(%arg0: i32, %arg1: i32) -> (i32, i32) {
    %c0_i32 = arith.constant 0 : i32
    return %arg0, %arg1 : i32, i32
  }
}

</mosaic_0001>

<llo_original>
// kernel: tpu_custom_call.1
$region0: #{tpu_custom_call.1}
  #allocation0 [shape = 'u32[]', space=smem, size = 0x4, offset = 0x4, fixed_abs, tag = 'smem constant byte address 0x4 - core index']
  #allocation1 [shape = 'u32[144,128]{1,0:T(1,128)}', space=vmem, size = 0x12000, scoped, tag = 'internal scratch']
  %s0 = inlined_call_operand.vmem [shape: f32[8,2], index: 0, kind: input, shape index: {}]
  %s1 = inlined_call_operand.hbm [shape: f32[8,256], index: 1, kind: input, shape index: {}]
  %s2 = inlined_call_operand.hbm [shape: f32[8,256], index: 2, kind: output, shape index: {}]
  %s3 = sld [smem:[#allocation0]]
  $region22: #{tpu_custom_call.1} parent=0
    _
  %s5 = ssub.s32 1, %s3
  %s6 = scalar_select 0, %s5, %s3
  $region1: #{tpu_custom_call.1} parent=0
    #allocation2 [shape = 'u8[8192]{0}', space=vmem, size = 0x2000, scoped, tag = 'input window, operand 1, single buffered']
    #allocation3 [shape = 's32[1]{0}', space=sflag, size = 0x4, scoped, tag = 'scoped memory for tpu_custom_call.1']
    #allocation4 [shape = 's32[1]{0}', space=sflag, size = 0x4, scoped, tag = 'scoped memory for tpu_custom_call.1']
    #allocation5 [shape = 'u8[8192]{0}', space=vmem, size = 0x2000, scoped, tag = 'output window, operand 0, single buffered']
    %7 = vsyncpa [#allocation3], 0
    %8 = vsyncpa [#allocation4], 0
    // Predicated region
    $region2: #{tpu_custom_call.1} parent=1 // pred_check
      _
    $region3: #{tpu_custom_call.1} parent=1 // pred_check_branch
      %10 = sbr.rel (0) target = $region5
    $region4: #{tpu_custom_call.1} parent=1 // pred_region
      _
    $region5: #{tpu_custom_call.1} parent=1 // pred_fallthru
      _
    // Predicated region
    $region6: #{tpu_custom_call.1} parent=1 // pred_check
      _
    $region7: #{tpu_custom_call.1} parent=1 // pred_check_branch
      %12 = sbr.rel (0) target = $region9
    $region8: #{tpu_custom_call.1} parent=1 // pred_region
      %s14 = ssub.s32 256, 256
      %15 = vsyncadd [#allocation3], %s14
      %s17 = sshll.u32 [#allocation2], 4
      %s18 = int_to_ptr.vmem [resolvable:$true] %s17
      %20 = dma.hbm_to_vmem [thread:$0]  %s1, 256, %s18, [#allocation3]
    $region9: #{tpu_custom_call.1} parent=1 // pred_fallthru
      _
    // Predicated region
    $region10: #{tpu_custom_call.1} parent=1 // pred_check
      _
    $region11: #{tpu_custom_call.1} parent=1 // pred_check_branch
      %22 = sbr.rel (0) target = $region13
    $region12: #{tpu_custom_call.1} parent=1 // pred_region
      %23 = dma.done [#allocation3], 256
    $region13: #{tpu_custom_call.1} parent=1 // pred_fallthru
      _
    %v24 = vld [vmem:[%s0] sm:$0xff]
    %v25 = vld [vmem:[#allocation2] sm:$0xff]
    %v26 = vld [vmem:[#allocation2 + $0x8] sm:$0xff]
    %28 = vset.pattern.permute.xlu0 0
    %29 = vperm.xlu0 %28, %v24
    %v30 = vpop.permute.xlu0 %29
    %v32 = vmul.f32 %v25, %v30
    %v33 = vmul.f32 %v26, %v30
    %34 = vset.pattern.permute.xlu0 1
    %35 = vperm.xlu0 %34, %v24
    %v36 = vpop.permute.xlu0 %35
    %v38 = vadd.f32 %v32, %v36
    %v39 = vadd.f32 %v33, %v36
    %40 = vst [vmem:[#allocation5] sm:$0xff] %v38
    %41 = vst [vmem:[#allocation5 + $0x8] sm:$0xff] %v39
    // Predicated region
    $region14: #{tpu_custom_call.1} parent=1 // pred_check
      _
    $region15: #{tpu_custom_call.1} parent=1 // pred_check_branch
      %43 = sbr.rel (0) target = $region17
    $region16: #{tpu_custom_call.1} parent=1 // pred_region
      %s45 = ssub.s32 256, 256
      %46 = vsyncadd [#allocation4], %s45
      %s48 = sshll.u32 [#allocation5], 4
      %s49 = int_to_ptr.vmem [resolvable:$true] %s48
      %51 = dma.vmem_to_hbm [thread:$0]  %s49, 256, %s2, [#allocation4]
    $region17: #{tpu_custom_call.1} parent=1 // pred_fallthru
      _
    // Predicated region
    $region18: #{tpu_custom_call.1} parent=1 // pred_check
      _
    $region19: #{tpu_custom_call.1} parent=1 // pred_check_branch
      %53 = sbr.rel (0) target = $region21
    $region20: #{tpu_custom_call.1} parent=1 // pred_region
      %54 = dma.done [#allocation4], 256
    $region21: #{tpu_custom_call.1} parent=1 // pred_fallthru
      _
    %55 = vsyncpa [#allocation3], 1
    %56 = vsyncpa [#allocation4], 1

</llo_original>
